<compile_context>
chip_gen: v5e
topology: v5e:2x2
jax: 0.10.0
libtpu: 0.0.40
codegen_flags: <defaults>
</compile_context>

<pallas_src>
import jax
import jax.numpy as jnp
from jax.experimental import pallas as pl
from jax.experimental.pallas import tpu as pltpu


def _round_up(x: int, m: int) -> int:
    return (x + m - 1) // m * m


def joint_kernel(x_ts_ref, x_tab_ref,
                 w_t_ref, b_t_ref,
                 w_tab_ref, b_tab_ref,
                 w_fc_ref, b_fc_ref,
                 out_ref):
    # Time-series encoder: (tb, Dp_ts) @ (Dp_ts, Hp_t) -> f32; bias + ReLU in f32.
    h_t = jnp.dot(x_ts_ref[...], w_t_ref[...],
                  preferred_element_type=jnp.float32)
    h_t = jnp.maximum(h_t + b_t_ref[...], 0.0)

    # Tabular encoder: (tb, Dp_tab) @ (Dp_tab, Hp_tab) -> f32; bias + ReLU in f32.
    h_tab = jnp.dot(x_tab_ref[...], w_tab_ref[...],
                    preferred_element_type=jnp.float32)
    h_tab = jnp.maximum(h_tab + b_tab_ref[...], 0.0)

    # Fused classifier: lane-dim concat (both halves 128-aligned) followed by a
    # single full-depth MXU pass against the stacked [W_fc_time; W_fc_tab].
    h = jnp.concatenate(
        [h_t.astype(w_fc_ref.dtype), h_tab.astype(w_fc_ref.dtype)], axis=1)
    logits = jnp.dot(h, w_fc_ref[...], preferred_element_type=jnp.float32)

    out_ref[...] = (logits + b_fc_ref[...]).astype(out_ref.dtype)


def prepare_params(params, num_classes, compute_dtype=jnp.bfloat16):
    """One-time padding / casting of weights (hoisted out of the per-call path)."""
    D_ts, H_t = params["w_time"].shape
    D_tab, H_tab = params["w_tab"].shape

    Dp_ts = _round_up(D_ts, 128)
    Dp_tab = _round_up(D_tab, 128)
    Hp_t = _round_up(H_t, 128)
    Hp_tab = _round_up(H_tab, 128)
    Np = _round_up(num_classes, 128)

    pad2 = lambda a, r, c: jnp.pad(a, ((0, r - a.shape[0]), (0, c - a.shape[1])))

    w_t = pad2(params["w_time"].astype(compute_dtype), Dp_ts, Hp_t)
    w_tab = pad2(params["w_tab"].astype(compute_dtype), Dp_tab, Hp_tab)
    b_t = pad2(params["b_time"].astype(jnp.float32)[None, :], 1, Hp_t)
    b_tab = pad2(params["b_tab"].astype(jnp.float32)[None, :], 1, Hp_tab)

    # Split classifier weight row-wise (time rows first, matching the concat
    # order), pad each half, then stack -> one (Hp_t + Hp_tab, Np) operand for
    # a single full-depth classifier matmul.
    w_fc = params["w_fc"].astype(compute_dtype)            # (H_t + H_tab, C)
    w_fc_t = pad2(w_fc[:H_t], Hp_t, Np)
    w_fc_tab = pad2(w_fc[H_t:], Hp_tab, Np)
    w_fc_stacked = jnp.concatenate([w_fc_t, w_fc_tab], axis=0)
    b_fc = pad2(params["b_fc"].astype(jnp.float32)[None, :], 1, Np)

    return {
        "w_time": w_t, "b_time": b_t,
        "w_tab": w_tab, "b_tab": b_tab,
        "w_fc": w_fc_stacked, "b_fc": b_fc,
        "dims": dict(D_ts=D_ts, D_tab=D_tab, H_t=H_t, H_tab=H_tab,
                     Dp_ts=Dp_ts, Dp_tab=Dp_tab, Hp_t=Hp_t, Hp_tab=Hp_tab,
                     Np=Np, num_classes=num_classes),
    }


def joint_classifier_forward(x_ts, x_tab, prepared, tb=256):
    """x_ts: (B, T, C); x_tab: (B, F_tab). Returns (B, num_classes) f32 logits."""
    d = prepared["dims"]
    cdt = prepared["w_time"].dtype
    B = x_ts.shape[0]

    x_ts_flat = x_ts.reshape(B, -1)                       # flatten in the wrapper
    assert x_ts_flat.shape[1] == d["D_ts"]
    assert x_tab.shape[1] == d["D_tab"]

    # Batch tile: multiple of 16 (bf16 sublane packing), never larger than the
    # padded batch; ensure >= 2 grid steps when the batch allows it (v7x has
    # 2 TensorCores and shards the "parallel" grid axis across them).
    tb_eff = min(tb, _round_up(B, 16))
    if _round_up(B, tb_eff) // tb_eff < 2 and B >= 32:
        tb_eff = _round_up(pl.cdiv(B, 2), 16)
    Bp = _round_up(B, tb_eff)
    grid = (Bp // tb_eff,)

    # Per-call activation padding only (weights were prepared once).
    x_ts_p = jnp.pad(x_ts_flat.astype(cdt),
                     ((0, Bp - B), (0, d["Dp_ts"] - d["D_ts"])))
    x_tab_p = jnp.pad(x_tab.astype(cdt),
                      ((0, Bp - B), (0, d["Dp_tab"] - d["D_tab"])))

    # Grid-invariant operands: full-array blocks, single-buffered (nothing to
    # prefetch since the index_map is constant) -> half the resident footprint.
    resident = lambda shape: pl.BlockSpec(shape, lambda i: (0, 0),
                                          pipeline_mode=pl.Buffered(1))

    # Explicit VMEM budget (v7x has only 64 MiB physical / 32 MiB scoped
    # default; v5e's scoped default is 16 MiB which blocks larger tiles).
    weight_bytes = ((prepared["w_time"].size + prepared["w_tab"].size
                     + prepared["w_fc"].size) * 2
                    + (prepared["b_time"].size + prepared["b_tab"].size
                       + prepared["b_fc"].size) * 4)
    io_bytes = (2 * tb_eff * (d["Dp_ts"] + d["Dp_tab"]) * 2    # 2-buffered inputs
                + 2 * tb_eff * d["Np"] * 2)                    # 2-buffered bf16 out
    scratch_bytes = tb_eff * (d["Hp_t"] + d["Hp_tab"] + d["Np"]) * 4 * 2
    vmem_limit = int(min(max(weight_bytes + io_bytes + scratch_bytes + (16 << 20),
                             32 << 20),
                         64 << 20))

    flops = 2 * Bp * (d["Dp_ts"] * d["Hp_t"] + d["Dp_tab"] * d["Hp_tab"]
                      + (d["Hp_t"] + d["Hp_tab"]) * d["Np"])
    bytes_accessed = (x_ts_p.size * 2 + x_tab_p.size * 2
                      + weight_bytes + Bp * d["Np"] * 2)
    cost = pl.CostEstimate(flops=flops, transcendentals=0,
                           bytes_accessed=bytes_accessed)

    out_padded = pl.pallas_call(
        joint_kernel,
        out_shape=jax.ShapeDtypeStruct((Bp, d["Np"]), jnp.bfloat16),
        grid_spec=pltpu.PrefetchScalarGridSpec(
            num_scalar_prefetch=0,
            grid=grid,
            in_specs=[
                pl.BlockSpec((tb_eff, d["Dp_ts"]), lambda i: (i, 0)),   # x_ts tile
                pl.BlockSpec((tb_eff, d["Dp_tab"]), lambda i: (i, 0)),  # x_tab tile
                resident((d["Dp_ts"], d["Hp_t"])),                      # W_time
                resident((1, d["Hp_t"])),                               # b_time
                resident((d["Dp_tab"], d["Hp_tab"])),                   # W_tab
                resident((1, d["Hp_tab"])),                             # b_tab
                resident((d["Hp_t"] + d["Hp_tab"], d["Np"])),           # W_fc stacked
                resident((1, d["Np"])),                                 # b_fc
            ],
            out_specs=pl.BlockSpec((tb_eff, d["Np"]), lambda i: (i, 0)),
        ),
        compiler_params=pltpu.CompilerParams(
            dimension_semantics=("parallel",),
            vmem_limit_bytes=vmem_limit),
        cost_estimate=cost,
    )(x_ts_p, x_tab_p,
      prepared["w_time"], prepared["b_time"],
      prepared["w_tab"], prepared["b_tab"],
      prepared["w_fc"], prepared["b_fc"])

    # bf16 store inside the kernel; slice + upcast outside.
    return out_padded[:B, :d["num_classes"]].astype(jnp.float32)


def _reference_forward(x_ts, x_tab, params, num_classes):
    """Pure-JAX reference using the same bf16-cast operands as the kernel."""
    f = lambda a: a.astype(jnp.bfloat16).astype(jnp.float32)
    xt = f(x_ts.reshape(x_ts.shape[0], -1))
    xb = f(x_tab)
    h_t = jnp.maximum(xt @ f(params["w_time"]) + params["b_time"], 0.0)
    h_b = jnp.maximum(xb @ f(params["w_tab"]) + params["b_tab"], 0.0)
    h_t = f(h_t)
    h_b = f(h_b)
    H_t = params["w_time"].shape[1]
    return (h_t @ f(params["w_fc"][:H_t])
            + h_b @ f(params["w_fc"][H_t:])
            + params["b_fc"])


if __name__ == "__main__":
    # Small shapes consistent with the module: batch=2, seq=8, channels=4,
    # tabular features=10, encoder output dims 32 / 16, num_classes=2.
    B, T, C = 2, 8, 4
    F_TAB = 10
    H_TIME, H_TAB = 32, 16
    NUM_CLASSES = 2

    key = jax.random.PRNGKey(0)
    ks = jax.random.split(key, 8)

    x_ts = jax.random.normal(ks[0], (B, T, C), jnp.float32)
    x_tab = jax.random.normal(ks[1], (B, F_TAB), jnp.float32)

    d_ts = T * C
    params = {
        # (in, out) layout == transpose of PyTorch nn.Linear's (out, in).
        "w_time": jax.random.normal(ks[2], (d_ts, H_TIME), jnp.float32) / jnp.sqrt(d_ts),
        "b_time": jax.random.normal(ks[3], (H_TIME,), jnp.float32) * 0.1,
        "w_tab": jax.random.normal(ks[4], (F_TAB, H_TAB), jnp.float32) / jnp.sqrt(F_TAB),
        "b_tab": jax.random.normal(ks[5], (H_TAB,), jnp.float32) * 0.1,
        "w_fc": jax.random.normal(ks[6], (H_TIME + H_TAB, NUM_CLASSES), jnp.float32)
                / jnp.sqrt(H_TIME + H_TAB),
        "b_fc": jax.random.normal(ks[7], (NUM_CLASSES,), jnp.float32) * 0.1,
    }

    # One-time weight preparation (padding / bf16 cast hoisted out of the call).
    prepared = prepare_params(params, NUM_CLASSES)
    prepared = jax.tree_util.tree_map(
        lambda a: jax.block_until_ready(a) if isinstance(a, jax.Array) else a,
        prepared)

    out = joint_classifier_forward(x_ts, x_tab, prepared)
    out = jax.block_until_ready(out)

    ref = _reference_forward(x_ts, x_tab, params, NUM_CLASSES)
    assert out.shape == (B, NUM_CLASSES), out.shape
    assert jnp.allclose(out, ref, atol=2e-2, rtol=2e-2), (out, ref)

    print("KERNEL_OK")
</pallas_src>

<mosaic_0001>
module attributes {stable_mosaic.version = 11 : i64} {
  func.func @joint_kernel(%arg0: i32, %arg1: memref<16x128xbf16, #tpu.memory_space<vmem>>, %arg2: memref<16x128xbf16, #tpu.memory_space<vmem>>, %arg3: memref<128x128xbf16, #tpu.memory_space<vmem>>, %arg4: memref<1x128xf32, #tpu.memory_space<vmem>>, %arg5: memref<128x128xbf16, #tpu.memory_space<vmem>>, %arg6: memref<1x128xf32, #tpu.memory_space<vmem>>, %arg7: memref<256x128xbf16, #tpu.memory_space<vmem>>, %arg8: memref<1x128xf32, #tpu.memory_space<vmem>>, %arg9: memref<16x128xbf16, #tpu.memory_space<vmem>>) attributes {dimension_semantics = [#tpu.dimension_semantics<parallel>], iteration_bounds = array<i64: 1>, scalar_prefetch = 0 : i64, scratch_operands = 0 : i64, tpu.core_type = #tpu.core_type<tc>, window_params = [{transform_indices = @transform_0, window_bounds = array<i64: 16, 128>}, {transform_indices = @transform_1, window_bounds = array<i64: 16, 128>}, {pipeline_mode = #tpu.pipeline_mode<synchronous>, transform_indices = @transform_2, window_bounds = array<i64: 128, 128>}, {pipeline_mode = #tpu.pipeline_mode<synchronous>, transform_indices = @transform_3, window_bounds = array<i64: 1, 128>}, {pipeline_mode = #tpu.pipeline_mode<synchronous>, transform_indices = @transform_4, window_bounds = array<i64: 128, 128>}, {pipeline_mode = #tpu.pipeline_mode<synchronous>, transform_indices = @transform_5, window_bounds = array<i64: 1, 128>}, {pipeline_mode = #tpu.pipeline_mode<synchronous>, transform_indices = @transform_6, window_bounds = array<i64: 256, 128>}, {pipeline_mode = #tpu.pipeline_mode<synchronous>, transform_indices = @transform_7, window_bounds = array<i64: 1, 128>}, {transform_indices = @transform_8, window_bounds = array<i64: 16, 128>}]} {
    %c0 = arith.constant 0 : index
    %c0_0 = arith.constant 0 : index
    %0 = vector.load %arg1[%c0, %c0_0] : memref<16x128xbf16, #tpu.memory_space<vmem>>, vector<16x128xbf16>
    %c0_1 = arith.constant 0 : index
    %c0_2 = arith.constant 0 : index
    %1 = vector.load %arg3[%c0_1, %c0_2] : memref<128x128xbf16, #tpu.memory_space<vmem>>, vector<128x128xbf16>
    %cst = arith.constant dense<0.000000e+00> : vector<16x128xf32>
    %2 = tpu.matmul %0, %1, %cst {dimension_numbers = #tpu.dot_dimension_numbers<[1], [0], [0], [1], [0, 0, 1, 1], [], []>} : vector<16x128xbf16>, vector<128x128xbf16>, vector<16x128xf32> -> vector<16x128xf32>
    %c0_3 = arith.constant 0 : index
    %c0_4 = arith.constant 0 : index
    %3 = vector.load %arg4[%c0_3, %c0_4] : memref<1x128xf32, #tpu.memory_space<vmem>>, vector<1x128xf32>
    %4 = vector.broadcast %3 : vector<1x128xf32> to vector<16x128xf32>
    %5 = arith.addf %2, %4 : vector<16x128xf32>
    %cst_5 = arith.constant 0.000000e+00 : f32
    %6 = vector.broadcast %cst_5 : f32 to vector<16x128xf32>
    %7 = arith.maximumf %5, %6 : vector<16x128xf32>
    %c0_6 = arith.constant 0 : index
    %c0_7 = arith.constant 0 : index
    %8 = vector.load %arg2[%c0_6, %c0_7] : memref<16x128xbf16, #tpu.memory_space<vmem>>, vector<16x128xbf16>
    %c0_8 = arith.constant 0 : index
    %c0_9 = arith.constant 0 : index
    %9 = vector.load %arg5[%c0_8, %c0_9] : memref<128x128xbf16, #tpu.memory_space<vmem>>, vector<128x128xbf16>
    %cst_10 = arith.constant dense<0.000000e+00> : vector<16x128xf32>
    %10 = tpu.matmul %8, %9, %cst_10 {dimension_numbers = #tpu.dot_dimension_numbers<[1], [0], [0], [1], [0, 0, 1, 1], [], []>} : vector<16x128xbf16>, vector<128x128xbf16>, vector<16x128xf32> -> vector<16x128xf32>
    %c0_11 = arith.constant 0 : index
    %c0_12 = arith.constant 0 : index
    %11 = vector.load %arg6[%c0_11, %c0_12] : memref<1x128xf32, #tpu.memory_space<vmem>>, vector<1x128xf32>
    %12 = vector.broadcast %11 : vector<1x128xf32> to vector<16x128xf32>
    %13 = arith.addf %10, %12 : vector<16x128xf32>
    %cst_13 = arith.constant 0.000000e+00 : f32
    %14 = vector.broadcast %cst_13 : f32 to vector<16x128xf32>
    %15 = arith.maximumf %13, %14 : vector<16x128xf32>
    %16 = arith.truncf %7 : vector<16x128xf32> to vector<16x128xbf16>
    %17 = arith.truncf %15 : vector<16x128xf32> to vector<16x128xbf16>
    %18 = tpu.concatenate %16, %17 in 1 : vector<16x128xbf16>, vector<16x128xbf16> -> vector<16x256xbf16>
    %c0_14 = arith.constant 0 : index
    %c0_15 = arith.constant 0 : index
    %19 = vector.load %arg7[%c0_14, %c0_15] : memref<256x128xbf16, #tpu.memory_space<vmem>>, vector<256x128xbf16>
    %cst_16 = arith.constant dense<0.000000e+00> : vector<16x128xf32>
    %20 = tpu.matmul %18, %19, %cst_16 {dimension_numbers = #tpu.dot_dimension_numbers<[1], [0], [0], [1], [0, 0, 1, 1], [], []>} : vector<16x256xbf16>, vector<256x128xbf16>, vector<16x128xf32> -> vector<16x128xf32>
    %c0_17 = arith.constant 0 : index
    %c0_18 = arith.constant 0 : index
    %21 = vector.load %arg8[%c0_17, %c0_18] : memref<1x128xf32, #tpu.memory_space<vmem>>, vector<1x128xf32>
    %22 = vector.broadcast %21 : vector<1x128xf32> to vector<16x128xf32>
    %23 = arith.addf %20, %22 : vector<16x128xf32>
    %24 = arith.truncf %23 : vector<16x128xf32> to vector<16x128xbf16>
    %c0_19 = arith.constant 0 : index
    %c0_20 = arith.constant 0 : index
    %25 = vector.load %arg9[%c0_19, %c0_20] : memref<16x128xbf16, #tpu.memory_space<vmem>>, vector<16x128xbf16>
    tpu.vector_store %arg9[%c0_19, %c0_20], %24 {strides = array<i32>} : memref<16x128xbf16, #tpu.memory_space<vmem>>, vector<16x128xbf16>,
    return
  }
  func.func @transform_0(%arg0: i32) -> (i32, i32) {
    %c0_i32 = arith.constant 0 : i32
    %c0_i32_0 = arith.constant 0 : i32
    return %arg0, %c0_i32 : i32, i32
  }
  func.func @transform_1(%arg0: i32) -> (i32, i32) {
    %c0_i32 = arith.constant 0 : i32
    %c0_i32_0 = arith.constant 0 : i32
    return %arg0, %c0_i32 : i32, i32
  }
  func.func @transform_2(%arg0: i32) -> (i32, i32) {
    %c0_i32 = arith.constant 0 : i32
    %c0_i32_0 = arith.constant 0 : i32
    %c0_i32_1 = arith.constant 0 : i32
    return %c0_i32, %c0_i32_0 : i32, i32
  }
  func.func @transform_3(%arg0: i32) -> (i32, i32) {
    %c0_i32 = arith.constant 0 : i32
    %c0_i32_0 = arith.constant 0 : i32
    %c0_i32_1 = arith.constant 0 : i32
    return %c0_i32, %c0_i32_0 : i32, i32
  }
  func.func @transform_4(%arg0: i32) -> (i32, i32) {
    %c0_i32 = arith.constant 0 : i32
    %c0_i32_0 = arith.constant 0 : i32
    %c0_i32_1 = arith.constant 0 : i32
    return %c0_i32, %c0_i32_0 : i32, i32
  }
  func.func @transform_5(%arg0: i32) -> (i32, i32) {
    %c0_i32 = arith.constant 0 : i32
    %c0_i32_0 = arith.constant 0 : i32
    %c0_i32_1 = arith.constant 0 : i32
    return %c0_i32, %c0_i32_0 : i32, i32
  }
  func.func @transform_6(%arg0: i32) -> (i32, i32) {
    %c0_i32 = arith.constant 0 : i32
    %c0_i32_0 = arith.constant 0 : i32
    %c0_i32_1 = arith.constant 0 : i32
    return %c0_i32, %c0_i32_0 : i32, i32
  }
  func.func @transform_7(%arg0: i32) -> (i32, i32) {
    %c0_i32 = arith.constant 0 : i32
    %c0_i32_0 = arith.constant 0 : i32
    %c0_i32_1 = arith.constant 0 : i32
    return %c0_i32, %c0_i32_0 : i32, i32
  }
  func.func @transform_8(%arg0: i32) -> (i32, i32) {
    %c0_i32 = arith.constant 0 : i32
    %c0_i32_0 = arith.constant 0 : i32
    return %arg0, %c0_i32 : i32, i32
  }
}

</mosaic_0001>

<llo_original>
// kernel: tpu_custom_call.1
$region0: #{tpu_custom_call.1}
  #allocation0 [shape = 'u32[]', space=smem, size = 0x4, offset = 0x4, fixed_abs, tag = 'smem constant byte address 0x4 - core index']
  #allocation1 [shape = 'u32[72,128]{1,0:T(1,128)}', space=vmem, size = 0x9000, scoped, tag = 'internal scratch']
  %s0 = inlined_call_operand.hbm [shape: bf16[16,128], index: 0, kind: input, shape index: {}]
  %s1 = inlined_call_operand.hbm [shape: bf16[16,128], index: 1, kind: input, shape index: {}]
  %s2 = inlined_call_operand.hbm [shape: bf16[128,128], index: 2, kind: input, shape index: {}]
  %s3 = inlined_call_operand.vmem [shape: f32[1,128], index: 3, kind: input, shape index: {}]
  %s4 = inlined_call_operand.hbm [shape: bf16[128,128], index: 4, kind: input, shape index: {}]
  %s5 = inlined_call_operand.vmem [shape: f32[1,128], index: 5, kind: input, shape index: {}]
  %s6 = inlined_call_operand.hbm [shape: bf16[256,128], index: 6, kind: input, shape index: {}]
  %s7 = inlined_call_operand.vmem [shape: f32[1,128], index: 7, kind: input, shape index: {}]
  %s8 = inlined_call_operand.hbm [shape: bf16[16,128], index: 8, kind: output, shape index: {}]
  %s9 = sld [smem:[#allocation0]]
  $region62: #{tpu_custom_call.1} parent=0
    _
  %s11 = ssub.s32 1, %s9
  %s12 = scalar_select 0, %s11, %s9
  $region1: #{tpu_custom_call.1} parent=0
    #allocation2 [shape = 'u8[4096]{0}', space=vmem, size = 0x1000, scoped, tag = 'input window, operand 0, single buffered']
    #allocation3 [shape = 's32[1]{0}', space=sflag, size = 0x4, scoped, tag = 'scoped memory for tpu_custom_call.1']
    #allocation4 [shape = 's32[1]{0}', space=sflag, size = 0x4, scoped, tag = 'scoped memory for tpu_custom_call.1']
    #allocation5 [shape = 'u8[4096]{0}', space=vmem, size = 0x1000, scoped, tag = 'input window, operand 1, single buffered']
    #allocation6 [shape = 's32[1]{0}', space=sflag, size = 0x4, scoped, tag = 'scoped memory for tpu_custom_call.1']
    #allocation7 [shape = 'u8[32768]{0}', space=vmem, size = 0x8000, scoped, tag = 'input window, operand 2, single buffered']
    #allocation8 [shape = 'u8[32768]{0}', space=vmem, size = 0x8000, scoped, tag = 'input window, operand 4, single buffered']
    #allocation9 [shape = 's32[1]{0}', space=sflag, size = 0x4, scoped, tag = 'scoped memory for tpu_custom_call.1']
    #allocation10 [shape = 'u8[65536]{0}', space=vmem, size = 0x10000, scoped, tag = 'input window, operand 6, single buffered']
    #allocation11 [shape = 'u8[4096]{0}', space=vmem, size = 0x1000, scoped, tag = 'output window, operand 0, single buffered']
    %13 = vsyncpa [#allocation3], 0
    %14 = vsyncpa [#allocation6], 0
    %15 = vsyncpa [#allocation9], 0
    %16 = vsyncpa [#allocation4], 0
    // Predicated region
    $region2: #{tpu_custom_call.1} parent=1 // pred_check
      _
    $region3: #{tpu_custom_call.1} parent=1 // pred_check_branch
      %18 = sbr.rel (0) target = $region5
    $region4: #{tpu_custom_call.1} parent=1 // pred_region
      %20 = vsyncadd [#allocation3], 0
      %s21 = sshll.u32 %s0, 4
      %s22 = int_to_ptr.hbm [resolvable:$true] %s21
      %s23 = sshll.u32 [#allocation2], 4
      %s24 = int_to_ptr.vmem [resolvable:$true] %s23
      %29 = dma.hbm_to_vmem [thread:$0]  %s22, 128, %s24, [#allocation3], 64, 64, 4
    $region5: #{tpu_custom_call.1} parent=1 // pred_fallthru
      _
    // Predicated region
    $region6: #{tpu_custom_call.1} parent=1 // pred_check
      _
    $region7: #{tpu_custom_call.1} parent=1 // pred_check_branch
      %31 = sbr.rel (0) target = $region9
    $region8: #{tpu_custom_call.1} parent=1 // pred_region
      %33 = vsyncadd [#allocation6], 0
      %s34 = sshll.u32 %s1, 4
      %s35 = int_to_ptr.hbm [resolvable:$true] %s34
      %s36 = sshll.u32 [#allocation5], 4
      %s37 = int_to_ptr.vmem [resolvable:$true] %s36
      %42 = dma.hbm_to_vmem [thread:$0]  %s35, 128, %s37, [#allocation6], 64, 64, 4
    $region9: #{tpu_custom_call.1} parent=1 // pred_fallthru
      _
    // Predicated region
    $region10: #{tpu_custom_call.1} parent=1 // pred_check
      _
    $region11: #{tpu_custom_call.1} parent=1 // pred_check_branch
      %44 = sbr.rel (0) target = $region13
    $region12: #{tpu_custom_call.1} parent=1 // pred_region
      %46 = vsyncadd [#allocation6], 0
      %s47 = sshll.u32 %s2, 4
      %s48 = int_to_ptr.hbm [resolvable:$true] %s47
      %s49 = sshll.u32 [#allocation7], 4
      %s50 = int_to_ptr.vmem [resolvable:$true] %s49
      %55 = dma.hbm_to_vmem [thread:$0]  %s48, 1024, %s50, [#allocation6], 64, 64, 4
    $region13: #{tpu_custom_call.1} parent=1 // pred_fallthru
      _
    // Predicated region
    $region14: #{tpu_custom_call.1} parent=1 // pred_check
      _
    $region15: #{tpu_custom_call.1} parent=1 // pred_check_branch
      %57 = sbr.rel (0) target = $region17
    $region16: #{tpu_custom_call.1} parent=1 // pred_region
      _
    $region17: #{tpu_custom_call.1} parent=1 // pred_fallthru
      _
    // Predicated region
    $region18: #{tpu_custom_call.1} parent=1 // pred_check
      _
    $region19: #{tpu_custom_call.1} parent=1 // pred_check_branch
      %59 = sbr.rel (0) target = $region21
    $region20: #{tpu_custom_call.1} parent=1 // pred_region
      %61 = vsyncadd [#allocation9], 0
      %s62 = sshll.u32 %s4, 4
      %s63 = int_to_ptr.hbm [resolvable:$true] %s62
      %s64 = sshll.u32 [#allocation8], 4
      %s65 = int_to_ptr.vmem [resolvable:$true] %s64
      %70 = dma.hbm_to_vmem [thread:$0]  %s63, 1024, %s65, [#allocation9], 64, 64, 4
    $region21: #{tpu_custom_call.1} parent=1 // pred_fallthru
      _
    // Predicated region
    $region22: #{tpu_custom_call.1} parent=1 // pred_check
      _
    $region23: #{tpu_custom_call.1} parent=1 // pred_check_branch
      %72 = sbr.rel (0) target = $region25
    $region24: #{tpu_custom_call.1} parent=1 // pred_region
      _
    $region25: #{tpu_custom_call.1} parent=1 // pred_fallthru
      _
    // Predicated region
    $region26: #{tpu_custom_call.1} parent=1 // pred_check
      _
    $region27: #{tpu_custom_call.1} parent=1 // pred_check_branch
      %74 = sbr.rel (0) target = $region29
    $region28: #{tpu_custom_call.1} parent=1 // pred_region
      %76 = vsyncadd [#allocation9], 0
      %s77 = sshll.u32 %s6, 4
      %s78 = int_to_ptr.hbm [resolvable:$true] %s77
      %s79 = sshll.u32 [#allocation10], 4
      %s80 = int_to_ptr.vmem [resolvable:$true] %s79
      %85 = dma.hbm_to_vmem [thread:$0]  %s78, 2048, %s80, [#allocation9], 64, 64, 4
    $region29: #{tpu_custom_call.1} parent=1 // pred_fallthru
      _
    // Predicated region
    $region30: #{tpu_custom_call.1} parent=1 // pred_check
      _
    $region31: #{tpu_custom_call.1} parent=1 // pred_check_branch
      %87 = sbr.rel (0) target = $region33
    $region32: #{tpu_custom_call.1} parent=1 // pred_region
      _
    $region33: #{tpu_custom_call.1} parent=1 // pred_fallthru
      _
    // Predicated region
    $region34: #{tpu_custom_call.1} parent=1 // pred_check
      _
    $region35: #{tpu_custom_call.1} parent=1 // pred_check_branch
      %89 = sbr.rel (0) target = $region37
    $region36: #{tpu_custom_call.1} parent=1 // pred_region
      %91 = dma.done [#allocation3], 128
    $region37: #{tpu_custom_call.1} parent=1 // pred_fallthru
      _
    // Predicated region
    $region38: #{tpu_custom_call.1} parent=1 // pred_check
      _
    $region39: #{tpu_custom_call.1} parent=1 // pred_check_branch
      %93 = sbr.rel (0) target = $region41
    $region40: #{tpu_custom_call.1} parent=1 // pred_region
      %95 = dma.done [#allocation6], 128
    $region41: #{tpu_custom_call.1} parent=1 // pred_fallthru
      _
    // Predicated region
    $region42: #{tpu_custom_call.1} parent=1 // pred_check
      _
    $region43: #{tpu_custom_call.1} parent=1 // pred_check_branch
      %97 = sbr.rel (0) target = $region45
    $region44: #{tpu_custom_call.1} parent=1 // pred_region
      %99 = dma.done [#allocation6], 1024
    $region45: #{tpu_custom_call.1} parent=1 // pred_fallthru
      _
    // Predicated region
    $region46: #{tpu_custom_call.1} parent=1 // pred_check
      _
    $region47: #{tpu_custom_call.1} parent=1 // pred_check_branch
      %101 = sbr.rel (0) target = $region49
    $region48: #{tpu_custom_call.1} parent=1 // pred_region
      %103 = dma.done [#allocation9], 1024
    $region49: #{tpu_custom_call.1} parent=1 // pred_fallthru
      _
    // Predicated region
    $region50: #{tpu_custom_call.1} parent=1 // pred_check
      _
    $region51: #{tpu_custom_call.1} parent=1 // pred_check_branch
      %105 = sbr.rel (0) target = $region53
    $region52: #{tpu_custom_call.1} parent=1 // pred_region
      %107 = dma.done [#allocation9], 2048
    $region53: #{tpu_custom_call.1} parent=1 // pred_fallthru
      _
    %v108 = vld [vmem:[#allocation2] sm:$0xf]
    %v109 = vld [vmem:[#allocation2 + $0x4] sm:$0xf]
    %v110 = vld [vmem:[#allocation7] sm:$0xf]
    %v111 = vld [vmem:[#allocation7 + $0x4] sm:$0xf]
    %v112 = vld [vmem:[#allocation7 + $0x8] sm:$0xf]
    %v113 = vld [vmem:[#allocation7 + $0xc] sm:$0xf]
    %v114 = vld [vmem:[#allocation7 + $0x10] sm:$0xf]
    %v115 = vld [vmem:[#allocation7 + $0x14] sm:$0xf]
    %v116 = vld [vmem:[#allocation7 + $0x18] sm:$0xf]
    %v117 = vld [vmem:[#allocation7 + $0x1c] sm:$0xf]
    %v118 = vld [vmem:[#allocation7 + $0x20] sm:$0xf]
    %v119 = vld [vmem:[#allocation7 + $0x24] sm:$0xf]
    %v120 = vld [vmem:[#allocation7 + $0x28] sm:$0xf]
    %v121 = vld [vmem:[#allocation7 + $0x2c] sm:$0xf]
    %v122 = vld [vmem:[#allocation7 + $0x30] sm:$0xf]
    %v123 = vld [vmem:[#allocation7 + $0x34] sm:$0xf]
    %v124 = vld [vmem:[#allocation7 + $0x38] sm:$0xf]
    %v125 = vld [vmem:[#allocation7 + $0x3c] sm:$0xf]
    %v126 = vld [vmem:[%s3] sm:$0x1]
    %v128 = vperm.slane %v126, 0
    %v132 = vunpack.c.l.b16 %v108
    %v133 = vunpack.c.l.b16 %v109
    %v134 = vpack.c.b16 %v133, %v132
    %v152 = vunpack.c.l.b16 %v110
    %v153 = vunpack.c.l.b16 %v111
    %v154 = vunpack.c.l.b16 %v112
    %v155 = vunpack.c.l.b16 %v113
    %v156 = vunpack.c.l.b16 %v114
    %v157 = vunpack.c.l.b16 %v115
    %v158 = vunpack.c.l.b16 %v116
    %v159 = vunpack.c.l.b16 %v117
    %v160 = vunpack.c.l.b16 %v118
    %v161 = vunpack.c.l.b16 %v119
    %v162 = vunpack.c.l.b16 %v120
    %v163 = vunpack.c.l.b16 %v121
    %v164 = vunpack.c.l.b16 %v122
    %v165 = vunpack.c.l.b16 %v123
    %v166 = vunpack.c.l.b16 %v124
    %v167 = vunpack.c.l.b16 %v125
    %v168 = vpack.c.b16 %v153, %v152
    %v169 = vpack.c.b16 %v155, %v154
    %v170 = vpack.c.b16 %v157, %v156
    %v171 = vpack.c.b16 %v159, %v158
    %v172 = vpack.c.b16 %v161, %v160
    %v173 = vpack.c.b16 %v163, %v162
    %v174 = vpack.c.b16 %v165, %v164
    %v175 = vpack.c.b16 %v167, %v166
    %184 = vmatpush.bf16.msra.mxu0 %v175
    %185 = vmatpush.bf16.msra.mxu0 %v174
    %186 = vmatpush.bf16.msra.mxu0 %v173
    %187 = vmatpush.bf16.msra.mxu0 %v172
    %188 = vmatpush.bf16.msra.mxu0 %v171
    %189 = vmatpush.bf16.msra.mxu0 %v170
    %190 = vmatpush.bf16.msra.mxu0 %v169
    %191 = vmatpush.bf16.msra.mxu0 %v168
    %192 = vmatmul.bf16.gmra.mxu0 %v134
    %v193 = vpop.f32.mrf.mxu0
    %v194 = vadd.f32 %v128, %v193
    %v195 = vpop.f32.mrf.mxu0
    %v196 = vadd.f32 %v128, %v195
    %197 = vdwg.mxu0
    %v198 = vmax.f32 %v194, 0.0
    %v199 = vmax.f32 %v196, 0.0
    %v200 = vld [vmem:[#allocation5] sm:$0xf]
    %v201 = vld [vmem:[#allocation5 + $0x4] sm:$0xf]
    %v202 = vld [vmem:[#allocation8] sm:$0xf]
    %v203 = vld [vmem:[#allocation8 + $0x4] sm:$0xf]
    %v204 = vld [vmem:[#allocation8 + $0x8] sm:$0xf]
    %v205 = vld [vmem:[#allocation8 + $0xc] sm:$0xf]
    %v206 = vld [vmem:[#allocation8 + $0x10] sm:$0xf]
    %v207 = vld [vmem:[#allocation8 + $0x14] sm:$0xf]
    %v208 = vld [vmem:[#allocation8 + $0x18] sm:$0xf]
    %v209 = vld [vmem:[#allocation8 + $0x1c] sm:$0xf]
    %v210 = vld [vmem:[#allocation8 + $0x20] sm:$0xf]
    %v211 = vld [vmem:[#allocation8 + $0x24] sm:$0xf]
    %v212 = vld [vmem:[#allocation8 + $0x28] sm:$0xf]
    %v213 = vld [vmem:[#allocation8 + $0x2c] sm:$0xf]
    %v214 = vld [vmem:[#allocation8 + $0x30] sm:$0xf]
    %v215 = vld [vmem:[#allocation8 + $0x34] sm:$0xf]
    %v216 = vld [vmem:[#allocation8 + $0x38] sm:$0xf]
    %v217 = vld [vmem:[#allocation8 + $0x3c] sm:$0xf]
    %v218 = vld [vmem:[%s5] sm:$0x1]
    %v220 = vperm.slane %v218, 0
    %v224 = vunpack.c.l.b16 %v200
    %v225 = vunpack.c.l.b16 %v201
    %v226 = vpack.c.b16 %v225, %v224
    %v244 = vunpack.c.l.b16 %v202
    %v245 = vunpack.c.l.b16 %v203
    %v246 = vunpack.c.l.b16 %v204
    %v247 = vunpack.c.l.b16 %v205
    %v248 = vunpack.c.l.b16 %v206
    %v249 = vunpack.c.l.b16 %v207
    %v250 = vunpack.c.l.b16 %v208
    %v251 = vunpack.c.l.b16 %v209
    %v252 = vunpack.c.l.b16 %v210
    %v253 = vunpack.c.l.b16 %v211
    %v254 = vunpack.c.l.b16 %v212
    %v255 = vunpack.c.l.b16 %v213
    %v256 = vunpack.c.l.b16 %v214
    %v257 = vunpack.c.l.b16 %v215
    %v258 = vunpack.c.l.b16 %v216
    %v259 = vunpack.c.l.b16 %v217
    %v260 = vpack.c.b16 %v245, %v244
    %v261 = vpack.c.b16 %v247, %v246
    %v262 = vpack.c.b16 %v249, %v248
    %v263 = vpack.c.b16 %v251, %v250
    %v264 = vpack.c.b16 %v253, %v252
    %v265 = vpack.c.b16 %v255, %v254
    %v266 = vpack.c.b16 %v257, %v256
    %v267 = vpack.c.b16 %v259, %v258
    %276 = vmatpush.bf16.msra.mxu0 %v267
    %277 = vmatpush.bf16.msra.mxu0 %v266
    %278 = vmatpush.bf16.msra.mxu0 %v265
    %279 = vmatpush.bf16.msra.mxu0 %v264
    %280 = vmatpush.bf16.msra.mxu0 %v263
    %281 = vmatpush.bf16.msra.mxu0 %v262
    %282 = vmatpush.bf16.msra.mxu0 %v261
    %283 = vmatpush.bf16.msra.mxu0 %v260
    %284 = vmatmul.bf16.gmra.mxu0 %v226
    %v285 = vpop.f32.mrf.mxu0
    %v286 = vadd.f32 %v220, %v285
    %v287 = vpop.f32.mrf.mxu0
    %v288 = vadd.f32 %v220, %v287
    %289 = vdwg.mxu0
    %v290 = vmax.f32 %v286, 0.0
    %v291 = vmax.f32 %v288, 0.0
    %v292 = vpack.c.bf16 %v198, %v198
    %v293 = vpack.c.bf16 %v199, %v199
    %v294 = vpack.c.bf16 %v290, %v290
    %v295 = vpack.c.bf16 %v291, %v291
    %v298 = vunpack.c.l.b16 %v292
    %v299 = vunpack.c.l.b16 %v293
    %v300 = vpack.c.b16 %v299, %v298
    %v304 = vunpack.c.l.b16 %v294
    %v305 = vunpack.c.l.b16 %v295
    %v306 = vpack.c.b16 %v305, %v304
    %v308 = vld [vmem:[#allocation10] sm:$0xf]
    %v309 = vld [vmem:[#allocation10 + $0x4] sm:$0xf]
    %v310 = vld [vmem:[#allocation10 + $0x8] sm:$0xf]
    %v311 = vld [vmem:[#allocation10 + $0xc] sm:$0xf]
    %v312 = vld [vmem:[#allocation10 + $0x10] sm:$0xf]
    %v313 = vld [vmem:[#allocation10 + $0x14] sm:$0xf]
    %v314 = vld [vmem:[#allocation10 + $0x18] sm:$0xf]
    %v315 = vld [vmem:[#allocation10 + $0x1c] sm:$0xf]
    %v316 = vld [vmem:[#allocation10 + $0x20] sm:$0xf]
    %v317 = vld [vmem:[#allocation10 + $0x24] sm:$0xf]
    %v318 = vld [vmem:[#allocation10 + $0x28] sm:$0xf]
    %v319 = vld [vmem:[#allocation10 + $0x2c] sm:$0xf]
    %v320 = vld [vmem:[#allocation10 + $0x30] sm:$0xf]
    %v321 = vld [vmem:[#allocation10 + $0x34] sm:$0xf]
    %v322 = vld [vmem:[#allocation10 + $0x38] sm:$0xf]
    %v323 = vld [vmem:[#allocation10 + $0x3c] sm:$0xf]
    %v324 = vld [vmem:[#allocation10 + $0x40] sm:$0xf]
    %v325 = vld [vmem:[#allocation10 + $0x44] sm:$0xf]
    %v326 = vld [vmem:[#allocation10 + $0x48] sm:$0xf]
    %v327 = vld [vmem:[#allocation10 + $0x4c] sm:$0xf]
    %v328 = vld [vmem:[#allocation10 + $0x50] sm:$0xf]
    %v329 = vld [vmem:[#allocation10 + $0x54] sm:$0xf]
    %v330 = vld [vmem:[#allocation10 + $0x58] sm:$0xf]
    %v331 = vld [vmem:[#allocation10 + $0x5c] sm:$0xf]
    %v332 = vld [vmem:[#allocation10 + $0x60] sm:$0xf]
    %v333 = vld [vmem:[#allocation10 + $0x64] sm:$0xf]
    %v334 = vld [vmem:[#allocation10 + $0x68] sm:$0xf]
    %v335 = vld [vmem:[#allocation10 + $0x6c] sm:$0xf]
    %v336 = vld [vmem:[#allocation10 + $0x70] sm:$0xf]
    %v337 = vld [vmem:[#allocation10 + $0x74] sm:$0xf]
    %v338 = vld [vmem:[#allocation10 + $0x78] sm:$0xf]
    %v339 = vld [vmem:[#allocation10 + $0x7c] sm:$0xf]
    %v340 = vld [vmem:[%s7] sm:$0x1]
    %v342 = vperm.slane %v340, 0
    %v376 = vunpack.c.l.b16 %v308
    %v377 = vunpack.c.l.b16 %v309
    %v378 = vunpack.c.l.b16 %v310
    %v379 = vunpack.c.l.b16 %v311
    %v380 = vunpack.c.l.b16 %v312
    %v381 = vunpack.c.l.b16 %v313
    %v382 = vunpack.c.l.b16 %v314
    %v383 = vunpack.c.l.b16 %v315
    %v384 = vunpack.c.l.b16 %v316
    %v385 = vunpack.c.l.b16 %v317
    %v386 = vunpack.c.l.b16 %v318
    %v387 = vunpack.c.l.b16 %v319
    %v388 = vunpack.c.l.b16 %v320
    %v389 = vunpack.c.l.b16 %v321
    %v390 = vunpack.c.l.b16 %v322
    %v391 = vunpack.c.l.b16 %v323
    %v392 = vunpack.c.l.b16 %v324
    %v393 = vunpack.c.l.b16 %v325
    %v394 = vunpack.c.l.b16 %v326
    %v395 = vunpack.c.l.b16 %v327
    %v396 = vunpack.c.l.b16 %v328
    %v397 = vunpack.c.l.b16 %v329
    %v398 = vunpack.c.l.b16 %v330
    %v399 = vunpack.c.l.b16 %v331
    %v400 = vunpack.c.l.b16 %v332
    %v401 = vunpack.c.l.b16 %v333
    %v402 = vunpack.c.l.b16 %v334
    %v403 = vunpack.c.l.b16 %v335
    %v404 = vunpack.c.l.b16 %v336
    %v405 = vunpack.c.l.b16 %v337
    %v406 = vunpack.c.l.b16 %v338
    %v407 = vunpack.c.l.b16 %v339
    %v408 = vpack.c.b16 %v377, %v376
    %v409 = vpack.c.b16 %v379, %v378
    %v410 = vpack.c.b16 %v381, %v380
    %v411 = vpack.c.b16 %v383, %v382
    %v412 = vpack.c.b16 %v385, %v384
    %v413 = vpack.c.b16 %v387, %v386
    %v414 = vpack.c.b16 %v389, %v388
    %v415 = vpack.c.b16 %v391, %v390
    %v416 = vpack.c.b16 %v393, %v392
    %v417 = vpack.c.b16 %v395, %v394
    %v418 = vpack.c.b16 %v397, %v396
    %v419 = vpack.c.b16 %v399, %v398
    %v420 = vpack.c.b16 %v401, %v400
    %v421 = vpack.c.b16 %v403, %v402
    %v422 = vpack.c.b16 %v405, %v404
    %v423 = vpack.c.b16 %v407, %v406
    %440 = vmatpush.bf16.msra.mxu0 %v415
    %441 = vmatpush.bf16.msra.mxu0 %v414
    %442 = vmatpush.bf16.msra.mxu0 %v413
    %443 = vmatpush.bf16.msra.mxu0 %v412
    %444 = vmatpush.bf16.msra.mxu0 %v411
    %445 = vmatpush.bf16.msra.mxu0 %v410
    %446 = vmatpush.bf16.msra.mxu0 %v409
    %447 = vmatpush.bf16.msra.mxu0 %v408
    %448 = vmatmul.bf16.gmra.mxu0 %v300
    %v449 = vpop.f32.mrf.mxu0
    %v450 = vadd.f32 %v342, %v449
    %v451 = vpop.f32.mrf.mxu0
    %v452 = vadd.f32 %v342, %v451
    %453 = vdwg.mxu0
    %454 = vmatpush.bf16.msra.mxu0 %v423
    %455 = vmatpush.bf16.msra.mxu0 %v422
    %456 = vmatpush.bf16.msra.mxu0 %v421
    %457 = vmatpush.bf16.msra.mxu0 %v420
    %458 = vmatpush.bf16.msra.mxu0 %v419
    %459 = vmatpush.bf16.msra.mxu0 %v418
    %460 = vmatpush.bf16.msra.mxu0 %v417
    %461 = vmatpush.bf16.msra.mxu0 %v416
    %462 = vmatmul.bf16.gmra.mxu0 %v306
    %v463 = vpop.f32.mrf.mxu0
    %v464 = vadd.f32 %v450, %v463
    %v465 = vpop.f32.mrf.mxu0
    %v466 = vadd.f32 %v452, %v465
    %467 = vdwg.mxu0
    %v468 = vpack.c.bf16 %v464, %v464
    %v469 = vpack.c.bf16 %v466, %v466
    %470 = vst [vmem:[#allocation11] sm:$0xf] %v468
    %471 = vst [vmem:[#allocation11 + $0x4] sm:$0xf] %v469
    // Predicated region
    $region54: #{tpu_custom_call.1} parent=1 // pred_check
      _
    $region55: #{tpu_custom_call.1} parent=1 // pred_check_branch
      %473 = sbr.rel (0) target = $region57
    $region56: #{tpu_custom_call.1} parent=1 // pred_region
      %475 = vsyncadd [#allocation4], 0
      %s476 = sshll.u32 [#allocation11], 4
      %s477 = int_to_ptr.vmem [resolvable:$true] %s476
      %s478 = sshll.u32 %s8, 4
      %s479 = int_to_ptr.hbm [resolvable:$true] %s478
      %484 = dma.vmem_to_hbm [thread:$0]  %s477, 128, %s479, [#allocation4], 64, 64, 4
    $region57: #{tpu_custom_call.1} parent=1 // pred_fallthru
      _
    // Predicated region
    $region58: #{tpu_custom_call.1} parent=1 // pred_check
      _
    $region59: #{tpu_custom_call.1} parent=1 // pred_check_branch
      %486 = sbr.rel (0) target = $region61
    $region60: #{tpu_custom_call.1} parent=1 // pred_region
      %488 = dma.done [#allocation4], 128
    $region61: #{tpu_custom_call.1} parent=1 // pred_fallthru
      _
    %489 = vsyncpa [#allocation3], 1
    %490 = vsyncpa [#allocation6], 1
    %491 = vsyncpa [#allocation9], 1
    %492 = vsyncpa [#allocation4], 1

</llo_original>
